<compile_context>
chip_gen: v7x
topology: tpu7x:2x2x1
jax: 0.10.0
libtpu: 0.0.40
codegen_flags: <defaults>
</compile_context>

<pallas_src>
import functools

import numpy as np
import jax
import jax.numpy as jnp
from jax.experimental import pallas as pl
from jax.experimental.pallas import tpu as pltpu

NUM_GROUPS = 6   # GroupNorm(6, input_channels) in the PyTorch module
EPS = 1e-5


# ----------------------------------------------------------------------------- kernel
def _proj_kernel(x_ref, w_ref, gb_ref, gavg_ref, kat_ref, ket_ref, out_ref,
                 *, sigmoid, C, precision):
    """One grid step = one batch image; everything in (channels, H*W) layout."""
    f32 = jnp.float32
    dot = functools.partial(jnp.dot, precision=precision, preferred_element_type=f32)

    x = x_ref[0]                                            # (C, HW)

    # fused 1x1 convs: feature rows 0..C-1 (+ prediction row C) as ONE 2-D MXU matmul
    y = dot(w_ref[...], x)                                  # (C(+1), HW)
    yf = y[:C]                                              # feature-conv output

    # ---- GroupNorm(6, C): two-pass stats, native (C, HW) layout ----
    # gavg is the (C, C) "same-group average" matrix (entries 1/(gs*HW)): one tiny
    # resident-operand matmul turns per-channel sums into per-channel group means.
    csum = jnp.sum(yf, axis=1, keepdims=True)               # (C, 1)
    mean = dot(gavg_ref[...], csum)                         # (C, 1) group mean per chan
    d = yf - mean
    cssq = jnp.sum(d * d, axis=1, keepdims=True)            # (C, 1)
    var = dot(gavg_ref[...], cssq)                          # (C, 1) group var per chan
    scale = gb_ref[:, 0:1] * jax.lax.rsqrt(var + EPS)       # gamma * rsqrt(var+eps)
    feat = jnp.maximum(d * scale + gb_ref[:, 1:2], 0.0)     # norm + affine + ReLU, (C, HW)

    # ---- grid-project pooling (average-then-expand), feature channels ----
    cells_f = dot(feat, kat_ref[...])                       # (C, M*N) cell means
    out_ref[0, :C, :] = dot(cells_f, ket_ref[...])          # (C, HW) expanded, lane-dense

    if sigmoid:
        # prediction channel (dropout == identity at eval): row C of the fused conv
        pred = y[C:C + 1]                                    # (1, HW)
        cells_p = dot(pred, kat_ref[...])                    # (1, M*N)
        # expanded pooled prediction; the MxN matrix is recovered from this row in the
        # wrapper (one pixel per grid cell), so cells_p is computed exactly once.
        out_ref[0, C:, :] = jax.nn.sigmoid(dot(cells_p, ket_ref[...]))


# ------------------------------------------------------------------------- grid glue
def build_grid_mats(size, fracs):
    """Ah: (segs, size) averaging matrix; Eh: (size, segs) 0/1 expansion; segment starts."""
    bounds = [0] + [int(round(size * float(f))) for f in fracs] + [size]
    segs = len(bounds) - 1
    A = np.zeros((segs, size), dtype=np.float64)
    E = np.zeros((size, segs), dtype=np.float64)
    for m in range(segs):
        lo, hi = bounds[m], bounds[m + 1]
        if hi <= lo:
            raise ValueError("degenerate grid segment (check architecture fractions)")
        A[m, lo:hi] = 1.0 / (hi - lo)
        E[lo:hi, m] = 1.0
    return A, E, np.asarray(bounds[:-1], dtype=np.int32)


# ---------------------------------------------------------------------------- wrapper
def projection_module_forward(x, params, arch, *, sigmoid=False,
                              precision=jax.lax.Precision.DEFAULT):
    """JAX/Pallas equivalent of ProjectionModule.forward (eval mode)."""
    Wf, gamma, beta, Wp = params
    B, C, H, W = x.shape
    assert C % NUM_GROUPS == 0
    HW = H * W
    gs = C // NUM_GROUPS

    Ah, Eh, h_starts = build_grid_mats(H, arch[0])
    Av, Ev, w_starts = build_grid_mats(W, arch[1])
    M, N = Ah.shape[0], Av.shape[0]
    MN = M * N

    # fused conv weight: feature conv rows + (optional) prediction conv row
    wf = jnp.asarray(Wf, jnp.float32)
    if sigmoid:
        w = jnp.concatenate([wf, jnp.asarray(Wp, jnp.float32).reshape(1, C)], axis=0)
    else:
        w = wf
    gb = jnp.stack([jnp.asarray(gamma, jnp.float32),
                    jnp.asarray(beta, jnp.float32)], axis=1)            # (C, 2)
    gidx = np.arange(C) // gs
    gavg = jnp.asarray((gidx[:, None] == gidx[None, :]).astype(np.float64)
                       / float(gs * HW), jnp.float32)                   # (C, C)
    kat = jnp.asarray(np.kron(Ah, Av).T, jnp.float32)                   # (HW, MN)
    ket = jnp.asarray(np.kron(Eh, Ev).T, jnp.float32)                   # (MN, HW)

    xf = jnp.asarray(x, jnp.float32).reshape(B, C, HW)
    n_k = C + 1 if sigmoid else C
    kernel = functools.partial(_proj_kernel, sigmoid=sigmoid, C=C, precision=precision)

    rep2 = lambda b: (0, 0)
    ko = pl.pallas_call(
        kernel,
        out_shape=jax.ShapeDtypeStruct((B, n_k, HW), jnp.float32),
        grid=(B,),   # one image per step: grid >= 2 for B >= 2 (keeps both v7x cores busy)
        in_specs=[
            pl.BlockSpec((1, C, HW), lambda b: (b, 0, 0)),   # x, one batch image
            pl.BlockSpec(w.shape, rep2),                     # fused conv weight
            pl.BlockSpec((C, 2), rep2),                      # gamma | beta
            pl.BlockSpec((C, C), rep2),                      # group-average matrix
            pl.BlockSpec((HW, MN), rep2),                    # kron(Ah, Av)^T
            pl.BlockSpec((MN, HW), rep2),                    # kron(Eh, Ev)^T
        ],
        out_specs=pl.BlockSpec((1, n_k, HW), lambda b: (b, 0, 0)),
        compiler_params=pltpu.CompilerParams(
            dimension_semantics=("parallel",),
            vmem_limit_bytes=32 * 1024 * 1024),   # actual usage ~100 KB; cap is v7x-safe
    )(xf, w, gb, gavg, kat, ket)

    # base-input passthrough concat in XLA (kernel stores stay lane-dense and halved)
    out = jnp.concatenate([xf, ko], axis=1).reshape(B, C + n_k, H, W)
    if sigmoid:
        pred = ko[:, C:, :].reshape(B, 1, H, W)              # already sigmoid'ed
        # cell (m, n) mean == pooled value at any pixel of that cell -> gather one per cell
        mat = pred[:, :, h_starts, :][:, :, :, w_starts]     # (B, 1, M, N)
        return out, mat
    return out, None


# --------------------------------------------------------------------- numpy reference
def reference_forward(x, params, arch, sigmoid):
    Wf, gamma, beta, Wp = [np.asarray(p, np.float64) for p in params]
    x = np.asarray(x, np.float64)
    B, C, H, W = x.shape
    gs = C // NUM_GROUPS
    y = np.einsum('oc,bchw->bohw', Wf, x)
    yr = y.reshape(B, NUM_GROUPS, gs, H, W)
    mean = yr.mean(axis=(2, 3, 4), keepdims=True)
    var = yr.var(axis=(2, 3, 4), keepdims=True)
    yn = ((yr - mean) / np.sqrt(var + EPS)).reshape(B, C, H, W)
    feat = np.maximum(yn * gamma.reshape(1, C, 1, 1) + beta.reshape(1, C, 1, 1), 0.0)
    Ah, Eh, _ = build_grid_mats(H, arch[0])
    Av, Ev, _ = build_grid_mats(W, arch[1])
    Ph, Pv = Eh @ Ah, Ev @ Av
    featp = np.einsum('ip,bcpq,jq->bcij', Ph, feat, Pv)
    tensors = [x, featp]
    matrix = None
    if sigmoid:
        pred = np.einsum('oc,bchw->bohw', Wp.reshape(1, C), x)
        predp = 1.0 / (1.0 + np.exp(-np.einsum('ip,bcpq,jq->bcij', Ph, pred, Pv)))
        matrix = 1.0 / (1.0 + np.exp(-np.einsum('mp,bcpq,nq->bcmn', Ah, pred, Av)))
        tensors.append(predp)
    return np.concatenate(tensors, axis=1), matrix


# ------------------------------------------------------------------------------- main
if __name__ == "__main__":
    B, C, H, W = 2, 12, 16, 16   # C divisible by 6 (GroupNorm(6, C)); H*W = 256 lanes
    key = jax.random.PRNGKey(0)
    k1, k2, k3, k4, k5 = jax.random.split(key, 5)

    x = jax.random.normal(k1, (B, C, H, W), dtype=jnp.float32)
    Wf = 0.1 * jax.random.normal(k2, (C, C), dtype=jnp.float32)      # feature 1x1 conv
    Wp = 0.1 * jax.random.normal(k3, (1, C), dtype=jnp.float32)      # prediction 1x1 conv
    gamma = 1.0 + 0.1 * jax.random.normal(k4, (C,), dtype=jnp.float32)
    beta = 0.1 * jax.random.normal(k5, (C,), dtype=jnp.float32)
    params = (Wf, gamma, beta, Wp)

    # grid architecture: fractional horizontal / vertical line positions
    arch = ([0.25, 0.5, 0.75], [0.25, 0.75])   # -> 4 row segments, 3 column segments

    ok = True
    # DEFAULT (bf16 MXU passes, loose tol) and HIGHEST (f32, tight tol), both branches.
    for use_sigmoid in (False, True):
        ref_out, ref_mat = reference_forward(np.asarray(x), params, arch, use_sigmoid)
        for prec, tol in ((jax.lax.Precision.DEFAULT, 5e-2),
                          (jax.lax.Precision.HIGHEST, 5e-4)):
            out, mat = projection_module_forward(x, params, arch,
                                                 sigmoid=use_sigmoid, precision=prec)
            out = jax.block_until_ready(out)
            ok &= np.allclose(np.asarray(out), ref_out, atol=tol, rtol=tol)
            if use_sigmoid:
                mat = jax.block_until_ready(mat)
                ok &= np.allclose(np.asarray(mat), ref_mat, atol=tol, rtol=tol)
            else:
                ok &= mat is None

    if ok:
        print("KERNEL_OK")
    else:
        print("MISMATCH")
</pallas_src>

<mosaic_0001>
module attributes {stable_mosaic.version = 11 : i64} {
  func.func @_proj_kernel(%arg0: i32, %arg1: memref<1x12x256xf32, #tpu.memory_space<vmem>>, %arg2: memref<12x12xf32, #tpu.memory_space<vmem>>, %arg3: memref<12x2xf32, #tpu.memory_space<vmem>>, %arg4: memref<12x12xf32, #tpu.memory_space<vmem>>, %arg5: memref<256x12xf32, #tpu.memory_space<vmem>>, %arg6: memref<12x256xf32, #tpu.memory_space<vmem>>, %arg7: memref<1x12x256xf32, #tpu.memory_space<vmem>>) attributes {dimension_semantics = [#tpu.dimension_semantics<parallel>], iteration_bounds = array<i64: 2>, scalar_prefetch = 0 : i64, scratch_operands = 0 : i64, tpu.core_type = #tpu.core_type<tc>, window_params = [{transform_indices = @transform_0, window_bounds = array<i64: 1, 12, 256>}, {pipeline_mode = #tpu.pipeline_mode<synchronous>, transform_indices = @transform_1, window_bounds = array<i64: 12, 12>}, {pipeline_mode = #tpu.pipeline_mode<synchronous>, transform_indices = @transform_2, window_bounds = array<i64: 12, 2>}, {pipeline_mode = #tpu.pipeline_mode<synchronous>, transform_indices = @transform_3, window_bounds = array<i64: 12, 12>}, {pipeline_mode = #tpu.pipeline_mode<synchronous>, transform_indices = @transform_4, window_bounds = array<i64: 256, 12>}, {pipeline_mode = #tpu.pipeline_mode<synchronous>, transform_indices = @transform_5, window_bounds = array<i64: 12, 256>}, {transform_indices = @transform_6, window_bounds = array<i64: 1, 12, 256>}]} {
    %c0 = arith.constant 0 : index
    %c0_0 = arith.constant 0 : index
    %c0_1 = arith.constant 0 : index
    %0 = vector.load %arg1[%c0, %c0_0, %c0_1] : memref<1x12x256xf32, #tpu.memory_space<vmem>>, vector<1x12x256xf32>
    %1 = vector.shape_cast %0 : vector<1x12x256xf32> to vector<12x256xf32>
    %c0_2 = arith.constant 0 : index
    %c0_3 = arith.constant 0 : index
    %2 = vector.load %arg2[%c0_2, %c0_3] : memref<12x12xf32, #tpu.memory_space<vmem>>, vector<12x12xf32>
    %cst = arith.constant dense<0.000000e+00> : vector<12x256xf32>
    %3 = tpu.matmul %2, %1, %cst {dimension_numbers = #tpu.dot_dimension_numbers<[1], [0], [0], [1], [0, 0, 1, 1], [], []>} : vector<12x12xf32>, vector<12x256xf32>, vector<12x256xf32> -> vector<12x256xf32>
    %cst_4 = arith.constant dense<0.000000e+00> : vector<12xf32>
    %4 = vector.multi_reduction <add>, %3, %cst_4 [1] : vector<12x256xf32> to vector<12xf32>
    %5 = vector.shape_cast %4 : vector<12xf32> to vector<12x1xf32>
    %c0_5 = arith.constant 0 : index
    %c0_6 = arith.constant 0 : index
    %6 = vector.load %arg4[%c0_5, %c0_6] : memref<12x12xf32, #tpu.memory_space<vmem>>, vector<12x12xf32>
    %cst_7 = arith.constant dense<0.000000e+00> : vector<12x1xf32>
    %7 = tpu.matmul %6, %5, %cst_7 {dimension_numbers = #tpu.dot_dimension_numbers<[1], [0], [0], [1], [0, 0, 1, 1], [], []>} : vector<12x12xf32>, vector<12x1xf32>, vector<12x1xf32> -> vector<12x1xf32>
    %8 = vector.broadcast %7 : vector<12x1xf32> to vector<12x256xf32>
    %9 = arith.subf %3, %8 : vector<12x256xf32>
    %10 = arith.mulf %9, %9 : vector<12x256xf32>
    %cst_8 = arith.constant dense<0.000000e+00> : vector<12xf32>
    %11 = vector.multi_reduction <add>, %10, %cst_8 [1] : vector<12x256xf32> to vector<12xf32>
    %12 = vector.shape_cast %11 : vector<12xf32> to vector<12x1xf32>
    %c0_9 = arith.constant 0 : index
    %c0_10 = arith.constant 0 : index
    %13 = vector.load %arg4[%c0_9, %c0_10] : memref<12x12xf32, #tpu.memory_space<vmem>>, vector<12x12xf32>
    %cst_11 = arith.constant dense<0.000000e+00> : vector<12x1xf32>
    %14 = tpu.matmul %13, %12, %cst_11 {dimension_numbers = #tpu.dot_dimension_numbers<[1], [0], [0], [1], [0, 0, 1, 1], [], []>} : vector<12x12xf32>, vector<12x1xf32>, vector<12x1xf32> -> vector<12x1xf32>
    %c0_12 = arith.constant 0 : index
    %c0_13 = arith.constant 0 : index
    %15 = vector.load %arg3[%c0_12, %c0_13] : memref<12x2xf32, #tpu.memory_space<vmem>>, vector<12x1xf32>
    %cst_14 = arith.constant 9.99999974E-6 : f32
    %16 = vector.broadcast %cst_14 : f32 to vector<12x1xf32>
    %17 = arith.addf %14, %16 : vector<12x1xf32>
    %18 = math.rsqrt %17 : vector<12x1xf32>
    %19 = arith.mulf %15, %18 : vector<12x1xf32>
    %20 = vector.broadcast %19 : vector<12x1xf32> to vector<12x256xf32>
    %21 = arith.mulf %9, %20 : vector<12x256xf32>
    %c0_15 = arith.constant 0 : index
    %c1 = arith.constant 1 : index
    %22 = vector.load %arg3[%c0_15, %c1] : memref<12x2xf32, #tpu.memory_space<vmem>>, vector<12x1xf32>
    %23 = vector.broadcast %22 : vector<12x1xf32> to vector<12x256xf32>
    %24 = arith.addf %21, %23 : vector<12x256xf32>
    %cst_16 = arith.constant 0.000000e+00 : f32
    %25 = vector.broadcast %cst_16 : f32 to vector<12x256xf32>
    %26 = arith.maximumf %24, %25 : vector<12x256xf32>
    %c0_17 = arith.constant 0 : index
    %c0_18 = arith.constant 0 : index
    %27 = vector.load %arg5[%c0_17, %c0_18] : memref<256x12xf32, #tpu.memory_space<vmem>>, vector<256x12xf32>
    %cst_19 = arith.constant dense<0.000000e+00> : vector<12x12xf32>
    %28 = tpu.matmul %26, %27, %cst_19 {dimension_numbers = #tpu.dot_dimension_numbers<[1], [0], [0], [1], [0, 0, 1, 1], [], []>} : vector<12x256xf32>, vector<256x12xf32>, vector<12x12xf32> -> vector<12x12xf32>
    %c0_20 = arith.constant 0 : index
    %c0_21 = arith.constant 0 : index
    %29 = vector.load %arg6[%c0_20, %c0_21] : memref<12x256xf32, #tpu.memory_space<vmem>>, vector<12x256xf32>
    %cst_22 = arith.constant dense<0.000000e+00> : vector<12x256xf32>
    %30 = tpu.matmul %28, %29, %cst_22 {dimension_numbers = #tpu.dot_dimension_numbers<[1], [0], [0], [1], [0, 0, 1, 1], [], []>} : vector<12x12xf32>, vector<12x256xf32>, vector<12x256xf32> -> vector<12x256xf32>
    %c0_23 = arith.constant 0 : index
    %c0_24 = arith.constant 0 : index
    %c0_25 = arith.constant 0 : index
    %31 = vector.load %arg7[%c0_23, %c0_24, %c0_25] : memref<1x12x256xf32, #tpu.memory_space<vmem>>, vector<1x12x256xf32>
    %32 = vector.shape_cast %31 : vector<1x12x256xf32> to vector<12x256xf32>
    %33 = vector.shape_cast %30 : vector<12x256xf32> to vector<1x12x256xf32>
    tpu.vector_store %arg7[%c0_23, %c0_24, %c0_25], %33 {strides = array<i32>} : memref<1x12x256xf32, #tpu.memory_space<vmem>>, vector<1x12x256xf32>,
    return
  }
  func.func @transform_0(%arg0: i32) -> (i32, i32, i32) {
    %c0_i32 = arith.constant 0 : i32
    %c0_i32_0 = arith.constant 0 : i32
    %c0_i32_1 = arith.constant 0 : i32
    return %arg0, %c0_i32, %c0_i32_0 : i32, i32, i32
  }
  func.func @transform_1(%arg0: i32) -> (i32, i32) {
    %c0_i32 = arith.constant 0 : i32
    %c0_i32_0 = arith.constant 0 : i32
    %c0_i32_1 = arith.constant 0 : i32
    return %c0_i32, %c0_i32_0 : i32, i32
  }
  func.func @transform_2(%arg0: i32) -> (i32, i32) {
    %c0_i32 = arith.constant 0 : i32
    %c0_i32_0 = arith.constant 0 : i32
    %c0_i32_1 = arith.constant 0 : i32
    return %c0_i32, %c0_i32_0 : i32, i32
  }
  func.func @transform_3(%arg0: i32) -> (i32, i32) {
    %c0_i32 = arith.constant 0 : i32
    %c0_i32_0 = arith.constant 0 : i32
    %c0_i32_1 = arith.constant 0 : i32
    return %c0_i32, %c0_i32_0 : i32, i32
  }
  func.func @transform_4(%arg0: i32) -> (i32, i32) {
    %c0_i32 = arith.constant 0 : i32
    %c0_i32_0 = arith.constant 0 : i32
    %c0_i32_1 = arith.constant 0 : i32
    return %c0_i32, %c0_i32_0 : i32, i32
  }
  func.func @transform_5(%arg0: i32) -> (i32, i32) {
    %c0_i32 = arith.constant 0 : i32
    %c0_i32_0 = arith.constant 0 : i32
    %c0_i32_1 = arith.constant 0 : i32
    return %c0_i32, %c0_i32_0 : i32, i32
  }
  func.func @transform_6(%arg0: i32) -> (i32, i32, i32) {
    %c0_i32 = arith.constant 0 : i32
    %c0_i32_0 = arith.constant 0 : i32
    %c0_i32_1 = arith.constant 0 : i32
    return %arg0, %c0_i32, %c0_i32_0 : i32, i32, i32
  }
}

</mosaic_0001>

<llo_original>
// kernel: tpu_custom_call.1
$region0: #{tpu_custom_call.1}
  #allocation0 [shape = 'u32[]', space=smem, size = 0x4, offset = 0x4, fixed_abs, tag = 'smem constant byte address 0x4 - core index']
  #allocation1 [shape = 'u32[144,128]{1,0:T(1,128)}', space=vmem, size = 0x12000, scoped, tag = 'internal scratch']
  %s0 = inlined_call_operand.vmem [shape: f32[2,12,256], index: 0, kind: input, shape index: {}]
  %s1 = inlined_call_operand.vmem [shape: f32[12,12], index: 1, kind: input, shape index: {}]
  %s2 = inlined_call_operand.vmem [shape: f32[12,2], index: 2, kind: input, shape index: {}]
  %s3 = inlined_call_operand.vmem [shape: f32[12,12], index: 3, kind: input, shape index: {}]
  %s4 = inlined_call_operand.vmem [shape: f32[256,12], index: 4, kind: input, shape index: {}]
  %s5 = inlined_call_operand.vmem [shape: f32[12,256], index: 5, kind: input, shape index: {}]
  %s6 = inlined_call_operand.vmem [shape: f32[2,12,256], index: 6, kind: output, shape index: {}]
  %s7 = sld [smem:[#allocation0]]
  $region57: #{tpu_custom_call.1} parent=0
    _
  %s9 = ssub.s32 1, %s7
  %s10 = scalar_select 0, %s9, %s7
  loop: start=0, step=1, limit=4
  $region2: #{tpu_custom_call.1} parent=0 // loop_pre_header
    _
  $region3: #{tpu_custom_call.1} parent=0 // loop_header
    %s12 = sphi 0, %s16
    %p13 = scmp.ge.s32.totalorder %s12, 4
    %s22 = sphi 0, %s24
    %s25 = sphi 0, %s22
    %s26 = sphi 0, %s25
    %s42 = sphi 0, %s26
    %s46 = sphi 0, %s46
    %s48 = sphi 0, %s46
    %s49 = sphi 0, %s48
    %s63 = sphi 0, %s49
    %s67 = sphi 0, %s67
    %s69 = sphi 0, %s67
    %s70 = sphi 0, %s69
    %s84 = sphi 0, %s70
    %s88 = sphi 0, %s88
    %s90 = sphi 0, %s88
    %s91 = sphi 0, %s90
    %s105 = sphi 0, %s91
    %s109 = sphi 0, %s109
    %s111 = sphi 0, %s109
    %s112 = sphi 0, %s111
    %s126 = sphi 0, %s112
    %s130 = sphi 0, %s130
    %s132 = sphi 0, %s130
    %s133 = sphi 0, %s132
    %s147 = sphi 0, %s133
    %s153 = sphi 0, %s155
    %s156 = sphi 0, %s153
    %s157 = sphi 0, %s156
    %s173 = sphi 0, %s157
  $region4: #{tpu_custom_call.1} parent=0 // loop_header_branch
    %15 = sbr.rel (%p13) target = $region8
  $region5: #{tpu_custom_call.1} parent=0 // loop_body
    %s17 = ssub.s32 %s12, 1
    %s18 = ssub.s32 %s12, 2
    %s19 = sadd.s32 %s12, 1
    %s20 = ssub.s32 %s12, %s19
    %p21 = scmp.eq.s32.totalorder %s20, 0
    %s23 = sadd.s32 %s22, 1
    %s24 = scalar_select %p21, %s22, %s23
    %p27 = pneg %p21
    %p28 = scmp.eq.s32.totalorder %s12, 1
    %p29 = por %p27, %p28
    %p30 = scmp.ne.s32.totalorder %s22, %s25
    %p31 = scmp.eq.s32.totalorder %s12, 0
    %p32 = por %p30, %p31
    %p33 = scmp.ne.s32.totalorder %s22, %s25
    %p34 = scmp.eq.s32.totalorder %s17, 1
    %p35 = por %p33, %p34
    %p36 = scmp.ne.s32.totalorder %s25, %s26
    %p37 = scmp.eq.s32.totalorder %s17, 0
    %p38 = por %p36, %p37
    %p39 = scmp.ne.s32.totalorder %s25, %s26
    %p40 = scmp.eq.s32.totalorder %s18, 1
    %p41 = por %p39, %p40
    %p43 = scmp.ne.s32.totalorder %s26, %s42
    %p44 = scmp.eq.s32.totalorder %s18, 0
    %p45 = por %p43, %p44
    %s47 = sadd.s32 %s46, 1
    %p50 = scmp.eq.s32.totalorder %s12, 1
    %p51 = scmp.ne.s32.totalorder %s46, %s48
    %p52 = scmp.eq.s32.totalorder %s12, 0
    %p53 = por %p51, %p52
    %p54 = scmp.ne.s32.totalorder %s46, %s48
    %p55 = scmp.eq.s32.totalorder %s17, 1
    %p56 = por %p54, %p55
    %p57 = scmp.ne.s32.totalorder %s48, %s49
    %p58 = scmp.eq.s32.totalorder %s17, 0
    %p59 = por %p57, %p58
    %p60 = scmp.ne.s32.totalorder %s48, %s49
    %p61 = scmp.eq.s32.totalorder %s18, 1
    %p62 = por %p60, %p61
    %p64 = scmp.ne.s32.totalorder %s49, %s63
    %p65 = scmp.eq.s32.totalorder %s18, 0
    %p66 = por %p64, %p65
    %s68 = sadd.s32 %s67, 1
    %p71 = scmp.eq.s32.totalorder %s12, 1
    %p72 = scmp.ne.s32.totalorder %s67, %s69
    %p73 = scmp.eq.s32.totalorder %s12, 0
    %p74 = por %p72, %p73
    %p75 = scmp.ne.s32.totalorder %s67, %s69
    %p76 = scmp.eq.s32.totalorder %s17, 1
    %p77 = por %p75, %p76
    %p78 = scmp.ne.s32.totalorder %s69, %s70
    %p79 = scmp.eq.s32.totalorder %s17, 0
    %p80 = por %p78, %p79
    %p81 = scmp.ne.s32.totalorder %s69, %s70
    %p82 = scmp.eq.s32.totalorder %s18, 1
    %p83 = por %p81, %p82
    %p85 = scmp.ne.s32.totalorder %s70, %s84
    %p86 = scmp.eq.s32.totalorder %s18, 0
    %p87 = por %p85, %p86
    %s89 = sadd.s32 %s88, 1
    %p92 = scmp.eq.s32.totalorder %s12, 1
    %p93 = scmp.ne.s32.totalorder %s88, %s90
    %p94 = scmp.eq.s32.totalorder %s12, 0
    %p95 = por %p93, %p94
    %p96 = scmp.ne.s32.totalorder %s88, %s90
    %p97 = scmp.eq.s32.totalorder %s17, 1
    %p98 = por %p96, %p97
    %p99 = scmp.ne.s32.totalorder %s90, %s91
    %p100 = scmp.eq.s32.totalorder %s17, 0
    %p101 = por %p99, %p100
    %p102 = scmp.ne.s32.totalorder %s90, %s91
    %p103 = scmp.eq.s32.totalorder %s18, 1
    %p104 = por %p102, %p103
    %p106 = scmp.ne.s32.totalorder %s91, %s105
    %p107 = scmp.eq.s32.totalorder %s18, 0
    %p108 = por %p106, %p107
    %s110 = sadd.s32 %s109, 1
    %p113 = scmp.eq.s32.totalorder %s12, 1
    %p114 = scmp.ne.s32.totalorder %s109, %s111
    %p115 = scmp.eq.s32.totalorder %s12, 0
    %p116 = por %p114, %p115
    %p117 = scmp.ne.s32.totalorder %s109, %s111
    %p118 = scmp.eq.s32.totalorder %s17, 1
    %p119 = por %p117, %p118
    %p120 = scmp.ne.s32.totalorder %s111, %s112
    %p121 = scmp.eq.s32.totalorder %s17, 0
    %p122 = por %p120, %p121
    %p123 = scmp.ne.s32.totalorder %s111, %s112
    %p124 = scmp.eq.s32.totalorder %s18, 1
    %p125 = por %p123, %p124
    %p127 = scmp.ne.s32.totalorder %s112, %s126
    %p128 = scmp.eq.s32.totalorder %s18, 0
    %p129 = por %p127, %p128
    %s131 = sadd.s32 %s130, 1
    %p134 = scmp.eq.s32.totalorder %s12, 1
    %p135 = scmp.ne.s32.totalorder %s130, %s132
    %p136 = scmp.eq.s32.totalorder %s12, 0
    %p137 = por %p135, %p136
    %p138 = scmp.ne.s32.totalorder %s130, %s132
    %p139 = scmp.eq.s32.totalorder %s17, 1
    %p140 = por %p138, %p139
    %p141 = scmp.ne.s32.totalorder %s132, %s133
    %p142 = scmp.eq.s32.totalorder %s17, 0
    %p143 = por %p141, %p142
    %p144 = scmp.ne.s32.totalorder %s132, %s133
    %p145 = scmp.eq.s32.totalorder %s18, 1
    %p146 = por %p144, %p145
    %p148 = scmp.ne.s32.totalorder %s133, %s147
    %p149 = scmp.eq.s32.totalorder %s18, 0
    %p150 = por %p148, %p149
    %s151 = ssub.s32 %s12, %s19
    %p152 = scmp.eq.s32.totalorder %s151, 0
    %s154 = sadd.s32 %s153, 1
    %s155 = scalar_select %p152, %s153, %s154
    %p158 = pneg %p152
    %p159 = scmp.eq.s32.totalorder %s12, 1
    %p160 = por %p158, %p159
    %p161 = scmp.ne.s32.totalorder %s153, %s156
    %p162 = scmp.eq.s32.totalorder %s12, 0
    %p163 = por %p161, %p162
    %p164 = scmp.ne.s32.totalorder %s153, %s156
    %p165 = scmp.eq.s32.totalorder %s17, 1
    %p166 = por %p164, %p165
    %p167 = scmp.ne.s32.totalorder %s156, %s157
    %p168 = scmp.eq.s32.totalorder %s17, 0
    %p169 = por %p167, %p168
    %p170 = scmp.ne.s32.totalorder %s156, %s157
    %p171 = scmp.eq.s32.totalorder %s18, 1
    %p172 = por %p170, %p171
    %p174 = scmp.ne.s32.totalorder %s157, %s173
    %p175 = scmp.eq.s32.totalorder %s18, 0
    %p176 = por %p174, %p175
    %p177 = scmp.le.s32.totalorder 1, %s12
    %p178 = scmp.lt.s32.totalorder %s12, 3
    %p179 = pnand %p177, %p178
    %p180 = pneg %p179
    // Predicated region
    $region9: #{tpu_custom_call.1} parent=5 // pred_check
      _
    $region10: #{tpu_custom_call.1} parent=5 // pred_check_branch
      %182 = sbr.rel (%p179) target = $region12
    $region11: #{tpu_custom_call.1} parent=5 // pred_region
      %s183 = ssub.s32 %s12, 1
      // Predicated region
      $region13: #{tpu_custom_call.1} parent=11 // pred_check
        %p184 = pneg %p59
      $region14: #{tpu_custom_call.1} parent=11 // pred_check_branch
        %186 = sbr.rel (%p184) target = $region16
      $region15: #{tpu_custom_call.1} parent=11 // pred_region
        _
      $region16: #{tpu_custom_call.1} parent=11 // pred_fallthru
        _
      // Predicated region
      $region17: #{tpu_custom_call.1} parent=11 // pred_check
        %p187 = pneg %p80
      $region18: #{tpu_custom_call.1} parent=11 // pred_check_branch
        %189 = sbr.rel (%p187) target = $region20
      $region19: #{tpu_custom_call.1} parent=11 // pred_region
        _
      $region20: #{tpu_custom_call.1} parent=11 // pred_fallthru
        _
      // Predicated region
      $region21: #{tpu_custom_call.1} parent=11 // pred_check
        %p190 = pneg %p101
      $region22: #{tpu_custom_call.1} parent=11 // pred_check_branch
        %192 = sbr.rel (%p190) target = $region24
      $region23: #{tpu_custom_call.1} parent=11 // pred_region
        _
      $region24: #{tpu_custom_call.1} parent=11 // pred_fallthru
        _
      // Predicated region
      $region25: #{tpu_custom_call.1} parent=11 // pred_check
        %p193 = pneg %p122
      $region26: #{tpu_custom_call.1} parent=11 // pred_check_branch
        %195 = sbr.rel (%p193) target = $region28
      $region27: #{tpu_custom_call.1} parent=11 // pred_region
        _
      $region28: #{tpu_custom_call.1} parent=11 // pred_fallthru
        _
      // Predicated region
      $region29: #{tpu_custom_call.1} parent=11 // pred_check
        %p196 = pneg %p143
      $region30: #{tpu_custom_call.1} parent=11 // pred_check_branch
        %198 = sbr.rel (%p196) target = $region32
      $region31: #{tpu_custom_call.1} parent=11 // pred_region
        _
      $region32: #{tpu_custom_call.1} parent=11 // pred_fallthru
        _
    $region12: #{tpu_custom_call.1} parent=5 // pred_fallthru
      _
    %p199 = scmp.lt.s32.totalorder %s12, 2
    // Predicated region
    $region33: #{tpu_custom_call.1} parent=5 // pred_check
      %p200 = pneg %p199
    $region34: #{tpu_custom_call.1} parent=5 // pred_check_branch
      %202 = sbr.rel (%p200) target = $region36
    $region35: #{tpu_custom_call.1} parent=5 // pred_region
      // Predicated region
      $region37: #{tpu_custom_call.1} parent=35 // pred_check
        %p203 = pneg %p32
      $region38: #{tpu_custom_call.1} parent=35 // pred_check_branch
        %205 = sbr.rel (%p203) target = $region40
      $region39: #{tpu_custom_call.1} parent=35 // pred_region
        %p206 = scmp.lt.s32.totalorder %s12, 1
        %s207 = scalar_select %p206, %s12, 1
        %s208 = smul.addr %s207, 4
        %s209 = smul.addr %s208, 8
        %s210 = scalar_lea.vmem %s0, %s209
      $region40: #{tpu_custom_call.1} parent=35 // pred_fallthru
        _
    $region36: #{tpu_custom_call.1} parent=5 // pred_fallthru
      _
    %p211 = scmp.le.s32.totalorder 1, %s12
    %p212 = scmp.lt.s32.totalorder %s12, 3
    %p213 = pnand %p211, %p212
    %p214 = pneg %p213
    // Predicated region
    $region41: #{tpu_custom_call.1} parent=5 // pred_check
      _
    $region42: #{tpu_custom_call.1} parent=5 // pred_check_branch
      %216 = sbr.rel (%p213) target = $region44
    $region43: #{tpu_custom_call.1} parent=5 // pred_region
      %s217 = ssub.s32 %s12, 1
      %p218 = scmp.lt.s32.totalorder %s17, 1
      %s219 = scalar_select %p218, %s17, 1
      %s220 = smul.addr %s219, 4
      %s221 = smul.addr %s220, 8
      %s222 = scalar_lea.vmem %s0, %s221
      %p223 = pneg %p38
      %p224 = pneg %p35
      %p225 = pneg %p59
      %p226 = pneg %p56
      %p227 = pneg %p80
      %p228 = pneg %p77
      %p229 = pneg %p101
      %p230 = pneg %p98
      %p231 = pneg %p122
      %p232 = pneg %p119
      %p233 = pneg %p143
      %p234 = pneg %p140
      %p235 = pneg %p169
      %p236 = pneg %p166
      %p237 = scmp.lt.s32.totalorder %s17, 1
      %s238 = scalar_select %p237, %s17, 1
      %s239 = smul.addr %s238, 4
      %s240 = smul.addr %s239, 8
      %s241 = scalar_lea.vmem %s6, %s240
      %p242 = scmp.lt.s32.totalorder %s17, 1
      %s243 = scalar_select %p242, %s17, 1
      %s244 = smul.addr %s243, 4
      %s245 = smul.addr %s244, 8
      %s246 = scalar_lea.vmem %s0, %s245
      %p247 = scmp.lt.s32.totalorder %s17, 1
      %s248 = scalar_select %p247, %s17, 1
      %s249 = smul.addr %s248, 4
      %s250 = smul.addr %s249, 8
      %s251 = scalar_lea.vmem %s6, %s250
      %v252 = vld [vmem:[%s246] sm:$0xff]
      %v253 = vld [vmem:[%s246 + $0x8] sm:$0xff]
      %v254 = vld [vmem:[%s246 + $0x10] sm:$0xf]
      %v255 = vld [vmem:[%s246 + $0x18] sm:$0xf]
      %v256 = vld [vmem:[%s1] sm:$0xff]
      %v257 = vld [vmem:[%s1 + $0x8] sm:$0xf]
      %vm258 = vcmask 97280
      %v260 = vsel %vm258, %v256, 0
      %v263 = vsel %vm258, %v257, 0
      %vm265 = vcmask 1043456
      %v267 = vsel %vm265, %v254, 0
      %v270 = vsel %vm265, %v255, 0
      %272 = vmatprep.subr.mxu0 %v253
      %273 = vmatpush1.msra.mxu0 %v252
      %274 = vmatprep.subr.mxu0 %v270
      %275 = vmatpush1.msra.mxu0 %v267
      %276 = vmatprep.subr.mxu0 0.0
      %277 = vmatpush1.msra.mxu0 0.0
      %278 = vmatprep.subr.mxu0 0.0
      %279 = vmatpush1.msra.mxu0 0.0
      %280 = vmatprep.subr.mxu0 0.0
      %281 = vmatpush1.msra.mxu0 0.0
      %282 = vmatprep.subr.mxu0 0.0
      %283 = vmatpush1.msra.mxu0 0.0
      %284 = vmatprep.subr.mxu0 0.0
      %285 = vmatpush1.msra.mxu0 0.0
      %286 = vmatprep.subr.mxu0 0.0
      %287 = vmatpush1.msra.mxu0 0.0
      %288 = vmatprep.subr.mxu0 0.0
      %289 = vmatpush1.msra.mxu0 0.0
      %290 = vmatprep.subr.mxu0 0.0
      %291 = vmatpush1.msra.mxu0 0.0
      %292 = vmatprep.subr.mxu0 0.0
      %293 = vmatpush1.msra.mxu0 0.0
      %294 = vmatprep.subr.mxu0 0.0
      %295 = vmatpush1.msra.mxu0 0.0
      %296 = vmatprep.subr.mxu0 0.0
      %297 = vmatpush1.msra.mxu0 0.0
      %298 = vmatprep.subr.mxu0 0.0
      %299 = vmatpush1.msra.mxu0 0.0
      %300 = vmatprep.subr.mxu0 0.0
      %301 = vmatpush1.msra.mxu0 0.0
      %302 = vmatprep.subr.mxu0 0.0
      %303 = vmatpush1.msra.mxu0 0.0
      %304 = vmatprep.subr.mxu0 0.0
      %305 = vmatpush1.msra.mxu0 0.0
      %306 = vmatprep.subr.mxu0 0.0
      %307 = vmatpush1.msra.mxu0 0.0
      %308 = vmatprep.subr.mxu0 0.0
      %309 = vmatpush1.msra.mxu0 0.0
      %310 = vmatprep.subr.mxu0 0.0
      %311 = vmatpush1.msra.mxu0 0.0
      %312 = vmatprep.subr.mxu0 0.0
      %313 = vmatpush1.msra.mxu0 0.0
      %314 = vmatprep.subr.mxu0 0.0
      %315 = vmatpush1.msra.mxu0 0.0
      %316 = vmatprep.subr.mxu0 0.0
      %317 = vmatpush1.msra.mxu0 0.0
      %318 = vmatprep.subr.mxu0 0.0
      %319 = vmatpush1.msra.mxu0 0.0
      %320 = vmatprep.subr.mxu0 0.0
      %321 = vmatpush1.msra.mxu0 0.0
      %322 = vmatprep.subr.mxu0 0.0
      %323 = vmatpush1.msra.mxu0 0.0
      %324 = vmatprep.subr.mxu0 0.0
      %325 = vmatpush1.msra.mxu0 0.0
      %326 = vmatprep.subr.mxu0 0.0
      %327 = vmatpush1.msra.mxu0 0.0
      %328 = vmatprep.subr.mxu0 0.0
      %329 = vmatpush1.msra.mxu0 0.0
      %330 = vmatprep.subr.mxu0 0.0
      %331 = vmatpush1.msra.mxu0 0.0
      %332 = vmatprep.subr.mxu0 0.0
      %333 = vmatpush1.msra.mxu0 0.0
      %334 = vmatprep.subr.mxu0 0.0
      %335 = vmatpush1.msra.mxu0 0.0
      %336 = vmatprep.mubr.f32.mxu0 0.0
      %337 = vmatmul.mubr.f32.gmra.mrb[0].mxu0 %v260
      %v338 = vpop.f32.mrb[0].mxu0
      %v339 = vadd.f32 0.0, %v338
      %v340 = vpop.f32.mrb[0].mxu0
      %v341 = vadd.f32 0.0, %v340
      %342 = vmatprep.mubr.f32.mxu0 0.0
      %343 = vmatmul.mubr.f32.gmra.mrb[0].mxu0 %v263
      %v344 = vpop.f32.mrb[0].mxu0
      %v345 = vadd.f32 0.0, %v344
      %v346 = vpop.f32.mrb[0].mxu0
      %v347 = vadd.f32 0.0, %v346
      %348 = vdwg.mxu0
      %v349 = vadd.f32 %v339, %v341
      %350 = vadd.xlane.f32.xlu0 %v349
      %v351 = vpop.xlane.xlu0 %350
      %v352 = vsel %vm265, %v345, 0.0
      %v353 = vsel %vm265, %v347, 0.0
      %v354 = vadd.f32 %v352, %v353
      %355 = vadd.xlane.f32.xlu0 %v354
      %v356 = vpop.xlane.xlu0 %355
      %v357 = vld [vmem:[%s3] sm:$0xff]
      %v358 = vld [vmem:[%s3 + $0x8] sm:$0xf]
      %v360 = vsel %vm258, %v357, 0
      %v363 = vsel %vm258, %v358, 0
      %v366 = vsel %vm265, %v356, 0
      %368 = vmatprep.subr.mxu0 0.0
      %369 = vmatpush1.msra.mxu0 %v351
      %370 = vmatprep.subr.mxu0 0.0
      %371 = vmatpush1.msra.mxu0 %v366
      %372 = vmatprep.subr.mxu0 0.0
      %373 = vmatpush1.msra.mxu0 0.0
      %374 = vmatprep.subr.mxu0 0.0
      %375 = vmatpush1.msra.mxu0 0.0
      %376 = vmatprep.subr.mxu0 0.0
      %377 = vmatpush1.msra.mxu0 0.0
      %378 = vmatprep.subr.mxu0 0.0
      %379 = vmatpush1.msra.mxu0 0.0
      %380 = vmatprep.subr.mxu0 0.0
      %381 = vmatpush1.msra.mxu0 0.0
      %382 = vmatprep.subr.mxu0 0.0
      %383 = vmatpush1.msra.mxu0 0.0
      %384 = vmatprep.subr.mxu0 0.0
      %385 = vmatpush1.msra.mxu0 0.0
      %386 = vmatprep.subr.mxu0 0.0
      %387 = vmatpush1.msra.mxu0 0.0
      %388 = vmatprep.subr.mxu0 0.0
      %389 = vmatpush1.msra.mxu0 0.0
      %390 = vmatprep.subr.mxu0 0.0
      %391 = vmatpush1.msra.mxu0 0.0
      %392 = vmatprep.subr.mxu0 0.0
      %393 = vmatpush1.msra.mxu0 0.0
      %394 = vmatprep.subr.mxu0 0.0
      %395 = vmatpush1.msra.mxu0 0.0
      %396 = vmatprep.subr.mxu0 0.0
      %397 = vmatpush1.msra.mxu0 0.0
      %398 = vmatprep.subr.mxu0 0.0
      %399 = vmatpush1.msra.mxu0 0.0
      %400 = vmatprep.subr.mxu0 0.0
      %401 = vmatpush1.msra.mxu0 0.0
      %402 = vmatprep.subr.mxu0 0.0
      %403 = vmatpush1.msra.mxu0 0.0
      %404 = vmatprep.subr.mxu0 0.0
      %405 = vmatpush1.msra.mxu0 0.0
      %406 = vmatprep.subr.mxu0 0.0
      %407 = vmatpush1.msra.mxu0 0.0
      %408 = vmatprep.subr.mxu0 0.0
      %409 = vmatpush1.msra.mxu0 0.0
      %410 = vmatprep.subr.mxu0 0.0
      %411 = vmatpush1.msra.mxu0 0.0
      %412 = vmatprep.subr.mxu0 0.0
      %413 = vmatpush1.msra.mxu0 0.0
      %414 = vmatprep.subr.mxu0 0.0
      %415 = vmatpush1.msra.mxu0 0.0
      %416 = vmatprep.subr.mxu0 0.0
      %417 = vmatpush1.msra.mxu0 0.0
      %418 = vmatprep.subr.mxu0 0.0
      %419 = vmatpush1.msra.mxu0 0.0
      %420 = vmatprep.subr.mxu0 0.0
      %421 = vmatpush1.msra.mxu0 0.0
      %422 = vmatprep.subr.mxu0 0.0
      %423 = vmatpush1.msra.mxu0 0.0
      %424 = vmatprep.subr.mxu0 0.0
      %425 = vmatpush1.msra.mxu0 0.0
      %426 = vmatprep.subr.mxu0 0.0
      %427 = vmatpush1.msra.mxu0 0.0
      %428 = vmatprep.subr.mxu0 0.0
      %429 = vmatpush1.msra.mxu0 0.0
      %430 = vmatprep.subr.mxu0 0.0
      %431 = vmatpush1.msra.mxu0 0.0
      %432 = vmatprep.mubr.f32.mxu0 0.0
      %433 = vmatmul.mubr.f32.gmra.mrb[0].mxu0 %v360
      %v434 = vpop.f32.mrb[0].mxu0
      %v435 = vadd.f32 0.0, %v434
      %v436 = vpop.f32.mrb[0].mxu0
      %437 = vmatprep.mubr.f32.mxu0 0.0
      %438 = vmatmul.mubr.f32.gmra.mrb[0].mxu0 %v363
      %v439 = vpop.f32.mrb[0].mxu0
      %v440 = vadd.f32 0.0, %v439
      %v441 = vpop.f32.mrb[0].mxu0
      %442 = vdwg.mxu0
      %444 = vset.pattern.permute.xlu0 0
      %445 = vperm.xlu0 %444, %v435
      %v446 = vpop.permute.xlu0 %445
      %449 = vset.pattern.permute.xlu0 0
      %450 = vperm.xlu0 %449, %v440
      %v451 = vpop.permute.xlu0 %450
      %v453 = vsub.f32 %v339, %v446
      %v454 = vsub.f32 %v341, %v446
      %v455 = vsub.f32 %v345, %v451
      %v456 = vsub.f32 %v347, %v451
      %v457 = vmul.f32 %v453, %v453
      %v458 = vmul.f32 %v454, %v454
      %v459 = vmul.f32 %v455, %v455
      %v460 = vmul.f32 %v456, %v456
      %v461 = vadd.f32 %v457, %v458
      %462 = vadd.xlane.f32.xlu0 %v461
      %v463 = vpop.xlane.xlu0 %462
      %v464 = vsel %vm265, %v459, 0.0
      %v465 = vsel %vm265, %v460, 0.0
      %v466 = vadd.f32 %v464, %v465
      %467 = vadd.xlane.f32.xlu0 %v466
      %v468 = vpop.xlane.xlu0 %467
      %v469 = vld [vmem:[%s2] sm:$0xff]
      %v470 = vld [vmem:[%s2 + $0x8] sm:$0xf]
      %v472 = vsel %vm265, %v468, 0
      %474 = vmatprep.subr.mxu0 0.0
      %475 = vmatpush1.msra.mxu0 %v463
      %476 = vmatprep.subr.mxu0 0.0
      %477 = vmatpush1.msra.mxu0 %v472
      %478 = vmatprep.subr.mxu0 0.0
      %479 = vmatpush1.msra.mxu0 0.0
      %480 = vmatprep.subr.mxu0 0.0
      %481 = vmatpush1.msra.mxu0 0.0
      %482 = vmatprep.subr.mxu0 0.0
      %483 = vmatpush1.msra.mxu0 0.0
      %484 = vmatprep.subr.mxu0 0.0
      %485 = vmatpush1.msra.mxu0 0.0
      %486 = vmatprep.subr.mxu0 0.0
      %487 = vmatpush1.msra.mxu0 0.0
      %488 = vmatprep.subr.mxu0 0.0
      %489 = vmatpush1.msra.mxu0 0.0
      %490 = vmatprep.subr.mxu0 0.0
      %491 = vmatpush1.msra.mxu0 0.0
      %492 = vmatprep.subr.mxu0 0.0
      %493 = vmatpush1.msra.mxu0 0.0
      %494 = vmatprep.subr.mxu0 0.0
      %495 = vmatpush1.msra.mxu0 0.0
      %496 = vmatprep.subr.mxu0 0.0
      %497 = vmatpush1.msra.mxu0 0.0
      %498 = vmatprep.subr.mxu0 0.0
      %499 = vmatpush1.msra.mxu0 0.0
      %500 = vmatprep.subr.mxu0 0.0
      %501 = vmatpush1.msra.mxu0 0.0
      %502 = vmatprep.subr.mxu0 0.0
      %503 = vmatpush1.msra.mxu0 0.0
      %504 = vmatprep.subr.mxu0 0.0
      %505 = vmatpush1.msra.mxu0 0.0
      %506 = vmatprep.subr.mxu0 0.0
      %507 = vmatpush1.msra.mxu0 0.0
      %508 = vmatprep.subr.mxu0 0.0
      %509 = vmatpush1.msra.mxu0 0.0
      %510 = vmatprep.subr.mxu0 0.0
      %511 = vmatpush1.msra.mxu0 0.0
      %512 = vmatprep.subr.mxu0 0.0
      %513 = vmatpush1.msra.mxu0 0.0
      %514 = vmatprep.subr.mxu0 0.0
      %515 = vmatpush1.msra.mxu0 0.0
      %516 = vmatprep.subr.mxu0 0.0
      %517 = vmatpush1.msra.mxu0 0.0
      %518 = vmatprep.subr.mxu0 0.0
      %519 = vmatpush1.msra.mxu0 0.0
      %520 = vmatprep.subr.mxu0 0.0
      %521 = vmatpush1.msra.mxu0 0.0
      %522 = vmatprep.subr.mxu0 0.0
      %523 = vmatpush1.msra.mxu0 0.0
      %524 = vmatprep.subr.mxu0 0.0
      %525 = vmatpush1.msra.mxu0 0.0
      %526 = vmatprep.subr.mxu0 0.0
      %527 = vmatpush1.msra.mxu0 0.0
      %528 = vmatprep.subr.mxu0 0.0
      %529 = vmatpush1.msra.mxu0 0.0
      %530 = vmatprep.subr.mxu0 0.0
      %531 = vmatpush1.msra.mxu0 0.0
      %532 = vmatprep.subr.mxu0 0.0
      %533 = vmatpush1.msra.mxu0 0.0
      %534 = vmatprep.subr.mxu0 0.0
      %535 = vmatpush1.msra.mxu0 0.0
      %536 = vmatprep.subr.mxu0 0.0
      %537 = vmatpush1.msra.mxu0 0.0
      %538 = vmatprep.mubr.f32.mxu0 0.0
      %539 = vmatmul.mubr.f32.gmra.mrb[0].mxu0 %v360
      %v540 = vpop.f32.mrb[0].mxu0
      %v541 = vadd.f32 1e-05, %v540
      %v542 = vpop.f32.mrb[0].mxu0
      %543 = vmatprep.mubr.f32.mxu0 0.0
      %544 = vmatmul.mubr.f32.gmra.mrb[0].mxu0 %v363
      %v545 = vpop.f32.mrb[0].mxu0
      %v546 = vadd.f32 1e-05, %v545
      %v547 = vpop.f32.mrb[0].mxu0
      %548 = vdwg.mxu0
      %v549 = vrsqrt.pop %v541
      %v550 = vrsqrt.pop %v546
      %v551 = vmul.f32 %v469, %v549
      %v552 = vmul.f32 %v470, %v550
      %554 = vset.pattern.permute.xlu0 0
      %555 = vperm.xlu0 %554, %v551
      %v556 = vpop.permute.xlu0 %555
      %559 = vset.pattern.permute.xlu0 0
      %560 = vperm.xlu0 %559, %v552
      %v561 = vpop.permute.xlu0 %560
      %v563 = vmul.f32 %v453, %v556
      %v564 = vmul.f32 %v454, %v556
      %v565 = vmul.f32 %v455, %v561
      %v566 = vmul.f32 %v456, %v561
      %568 = vset.pattern.permute.xlu0 1
      %569 = vperm.xlu0 %568, %v469
      %v570 = vpop.permute.xlu0 %569
      %573 = vset.pattern.permute.xlu0 1
      %574 = vperm.xlu0 %573, %v470
      %v575 = vpop.permute.xlu0 %574
      %v577 = vadd.f32 %v563, %v570
      %v578 = vadd.f32 %v564, %v570
      %v579 = vadd.f32 %v565, %v575
      %v580 = vadd.f32 %v566, %v575
      %v581 = vmax.f32 %v577, 0.0
      %v582 = vmax.f32 %v578, 0.0
      %v583 = vmax.f32 %v579, 0.0
      %v584 = vmax.f32 %v580, 0.0
      %v585 = vld [vmem:[%s4] sm:$0xff]
      %v586 = vld [vmem:[%s4 + $0x8] sm:$0xff]
      %v587 = vld [vmem:[%s4 + $0x10] sm:$0xff]
      %v588 = vld [vmem:[%s4 + $0x18] sm:$0xff]
      %v589 = vld [vmem:[%s4 + $0x20] sm:$0xff]
      %v590 = vld [vmem:[%s4 + $0x28] sm:$0xff]
      %v591 = vld [vmem:[%s4 + $0x30] sm:$0xff]
      %v592 = vld [vmem:[%s4 + $0x38] sm:$0xff]
      %v593 = vld [vmem:[%s4 + $0x40] sm:$0xff]
      %v594 = vld [vmem:[%s4 + $0x48] sm:$0xff]
      %v595 = vld [vmem:[%s4 + $0x50] sm:$0xff]
      %v596 = vld [vmem:[%s4 + $0x58] sm:$0xff]
      %v597 = vld [vmem:[%s4 + $0x60] sm:$0xff]
      %v598 = vld [vmem:[%s4 + $0x68] sm:$0xff]
      %v599 = vld [vmem:[%s4 + $0x70] sm:$0xff]
      %v600 = vld [vmem:[%s4 + $0x78] sm:$0xff]
      %v601 = vld [vmem:[%s4 + $0x80] sm:$0xff]
      %v602 = vld [vmem:[%s4 + $0x88] sm:$0xff]
      %v603 = vld [vmem:[%s4 + $0x90] sm:$0xff]
      %v604 = vld [vmem:[%s4 + $0x98] sm:$0xff]
      %v605 = vld [vmem:[%s4 + $0xa0] sm:$0xff]
      %v606 = vld [vmem:[%s4 + $0xa8] sm:$0xff]
      %v607 = vld [vmem:[%s4 + $0xb0] sm:$0xff]
      %v608 = vld [vmem:[%s4 + $0xb8] sm:$0xff]
      %v609 = vld [vmem:[%s4 + $0xc0] sm:$0xff]
      %v610 = vld [vmem:[%s4 + $0xc8] sm:$0xff]
      %v611 = vld [vmem:[%s4 + $0xd0] sm:$0xff]
      %v612 = vld [vmem:[%s4 + $0xd8] sm:$0xff]
      %v613 = vld [vmem:[%s4 + $0xe0] sm:$0xff]
      %v614 = vld [vmem:[%s4 + $0xe8] sm:$0xff]
      %v615 = vld [vmem:[%s4 + $0xf0] sm:$0xff]
      %v616 = vld [vmem:[%s4 + $0xf8] sm:$0xff]
      %617 = vmatprep.subr.mxu0 0.0
      %618 = vmatpush1.msra.mxu0 %v585
      %619 = vmatprep.subr.mxu0 0.0
      %620 = vmatpush1.msra.mxu0 %v586
      %621 = vmatprep.subr.mxu0 0.0
      %622 = vmatpush1.msra.mxu0 %v587
      %623 = vmatprep.subr.mxu0 0.0
      %624 = vmatpush1.msra.mxu0 %v588
      %625 = vmatprep.subr.mxu0 0.0
      %626 = vmatpush1.msra.mxu0 %v589
      %627 = vmatprep.subr.mxu0 0.0
      %628 = vmatpush1.msra.mxu0 %v590
      %629 = vmatprep.subr.mxu0 0.0
      %630 = vmatpush1.msra.mxu0 %v591
      %631 = vmatprep.subr.mxu0 0.0
      %632 = vmatpush1.msra.mxu0 %v592
      %633 = vmatprep.subr.mxu0 0.0
      %634 = vmatpush1.msra.mxu0 %v593
      %635 = vmatprep.subr.mxu0 0.0
      %636 = vmatpush1.msra.mxu0 %v594
      %637 = vmatprep.subr.mxu0 0.0
      %638 = vmatpush1.msra.mxu0 %v595
      %639 = vmatprep.subr.mxu0 0.0
      %640 = vmatpush1.msra.mxu0 %v596
      %641 = vmatprep.subr.mxu0 0.0
      %642 = vmatpush1.msra.mxu0 %v597
      %643 = vmatprep.subr.mxu0 0.0
      %644 = vmatpush1.msra.mxu0 %v598
      %645 = vmatprep.subr.mxu0 0.0
      %646 = vmatpush1.msra.mxu0 %v599
      %647 = vmatprep.subr.mxu0 0.0
      %648 = vmatpush1.msra.mxu0 %v600
      %649 = vmatprep.subr.mxu0 0.0
      %650 = vmatpush1.msra.mxu0 %v601
      %651 = vmatprep.subr.mxu0 0.0
      %652 = vmatpush1.msra.mxu0 %v602
      %653 = vmatprep.subr.mxu0 0.0
      %654 = vmatpush1.msra.mxu0 %v603
      %655 = vmatprep.subr.mxu0 0.0
      %656 = vmatpush1.msra.mxu0 %v604
      %657 = vmatprep.subr.mxu0 0.0
      %658 = vmatpush1.msra.mxu0 %v605
      %659 = vmatprep.subr.mxu0 0.0
      %660 = vmatpush1.msra.mxu0 %v606
      %661 = vmatprep.subr.mxu0 0.0
      %662 = vmatpush1.msra.mxu0 %v607
      %663 = vmatprep.subr.mxu0 0.0
      %664 = vmatpush1.msra.mxu0 %v608
      %665 = vmatprep.subr.mxu0 0.0
      %666 = vmatpush1.msra.mxu0 %v609
      %667 = vmatprep.subr.mxu0 0.0
      %668 = vmatpush1.msra.mxu0 %v610
      %669 = vmatprep.subr.mxu0 0.0
      %670 = vmatpush1.msra.mxu0 %v611
      %671 = vmatprep.subr.mxu0 0.0
      %672 = vmatpush1.msra.mxu0 %v612
      %673 = vmatprep.subr.mxu0 0.0
      %674 = vmatpush1.msra.mxu0 %v613
      %675 = vmatprep.subr.mxu0 0.0
      %676 = vmatpush1.msra.mxu0 %v614
      %677 = vmatprep.subr.mxu0 0.0
      %678 = vmatpush1.msra.mxu0 %v615
      %679 = vmatprep.subr.mxu0 0.0
      %680 = vmatpush1.msra.mxu0 %v616
      %681 = vmatprep.mubr.f32.mxu0 %v582
      %682 = vmatmul.mubr.f32.gmra.mrb[0].mxu0 %v581
      %v683 = vpop.f32.mrb[0].mxu0
      %v684 = vadd.f32 0.0, %v683
      %v685 = vpop.f32.mrb[0].mxu0
      %686 = vmatprep.mubr.f32.mxu0 %v584
      %687 = vmatmul.mubr.f32.gmra.mrb[0].mxu0 %v583
      %v688 = vpop.f32.mrb[0].mxu0
      %v689 = vadd.f32 0.0, %v688
      %v690 = vpop.f32.mrb[0].mxu0
      %691 = vdwg.mxu0
      %v692 = vld [vmem:[%s5] sm:$0xff]
      %v693 = vld [vmem:[%s5 + $0x8] sm:$0xff]
      %v694 = vld [vmem:[%s5 + $0x10] sm:$0xf]
      %v695 = vld [vmem:[%s5 + $0x18] sm:$0xf]
      %v697 = vsel %vm258, %v684, 0
      %v700 = vsel %vm258, %v689, 0
      %v703 = vsel %vm265, %v694, 0
      %v706 = vsel %vm265, %v695, 0
      %708 = vmatprep.subr.mxu0 %v693
      %709 = vmatpush1.msra.mxu0 %v692
      %710 = vmatprep.subr.mxu0 %v706
      %711 = vmatpush1.msra.mxu0 %v703
      %712 = vmatprep.subr.mxu0 0.0
      %713 = vmatpush1.msra.mxu0 0.0
      %714 = vmatprep.subr.mxu0 0.0
      %715 = vmatpush1.msra.mxu0 0.0
      %716 = vmatprep.subr.mxu0 0.0
      %717 = vmatpush1.msra.mxu0 0.0
      %718 = vmatprep.subr.mxu0 0.0
      %719 = vmatpush1.msra.mxu0 0.0
      %720 = vmatprep.subr.mxu0 0.0
      %721 = vmatpush1.msra.mxu0 0.0
      %722 = vmatprep.subr.mxu0 0.0
      %723 = vmatpush1.msra.mxu0 0.0
      %724 = vmatprep.subr.mxu0 0.0
      %725 = vmatpush1.msra.mxu0 0.0
      %726 = vmatprep.subr.mxu0 0.0
      %727 = vmatpush1.msra.mxu0 0.0
      %728 = vmatprep.subr.mxu0 0.0
      %729 = vmatpush1.msra.mxu0 0.0
      %730 = vmatprep.subr.mxu0 0.0
      %731 = vmatpush1.msra.mxu0 0.0
      %732 = vmatprep.subr.mxu0 0.0
      %733 = vmatpush1.msra.mxu0 0.0
      %734 = vmatprep.subr.mxu0 0.0
      %735 = vmatpush1.msra.mxu0 0.0
      %736 = vmatprep.subr.mxu0 0.0
      %737 = vmatpush1.msra.mxu0 0.0
      %738 = vmatprep.subr.mxu0 0.0
      %739 = vmatpush1.msra.mxu0 0.0
      %740 = vmatprep.subr.mxu0 0.0
      %741 = vmatpush1.msra.mxu0 0.0
      %742 = vmatprep.subr.mxu0 0.0
      %743 = vmatpush1.msra.mxu0 0.0
      %744 = vmatprep.subr.mxu0 0.0
      %745 = vmatpush1.msra.mxu0 0.0
      %746 = vmatprep.subr.mxu0 0.0
      %747 = vmatpush1.msra.mxu0 0.0
      %748 = vmatprep.subr.mxu0 0.0
      %749 = vmatpush1.msra.mxu0 0.0
      %750 = vmatprep.subr.mxu0 0.0
      %751 = vmatpush1.msra.mxu0 0.0
      %752 = vmatprep.subr.mxu0 0.0
      %753 = vmatpush1.msra.mxu0 0.0
      %754 = vmatprep.subr.mxu0 0.0
      %755 = vmatpush1.msra.mxu0 0.0
      %756 = vmatprep.subr.mxu0 0.0
      %757 = vmatpush1.msra.mxu0 0.0
      %758 = vmatprep.subr.mxu0 0.0
      %759 = vmatpush1.msra.mxu0 0.0
      %760 = vmatprep.subr.mxu0 0.0
      %761 = vmatpush1.msra.mxu0 0.0
      %762 = vmatprep.subr.mxu0 0.0
      %763 = vmatpush1.msra.mxu0 0.0
      %764 = vmatprep.subr.mxu0 0.0
      %765 = vmatpush1.msra.mxu0 0.0
      %766 = vmatprep.subr.mxu0 0.0
      %767 = vmatpush1.msra.mxu0 0.0
      %768 = vmatprep.subr.mxu0 0.0
      %769 = vmatpush1.msra.mxu0 0.0
      %770 = vmatprep.subr.mxu0 0.0
      %771 = vmatpush1.msra.mxu0 0.0
      %772 = vmatprep.mubr.f32.mxu0 0.0
      %773 = vmatmul.mubr.f32.gmra.mrb[0].mxu0 %v697
      %v774 = vpop.f32.mrb[0].mxu0
      %v775 = vadd.f32 0.0, %v774
      %v776 = vpop.f32.mrb[0].mxu0
      %v777 = vadd.f32 0.0, %v776
      %778 = vmatprep.mubr.f32.mxu0 0.0
      %779 = vmatmul.mubr.f32.gmra.mrb[0].mxu0 %v700
      %v780 = vpop.f32.mrb[0].mxu0
      %v781 = vadd.f32 0.0, %v780
      %v782 = vpop.f32.mrb[0].mxu0
      %v783 = vadd.f32 0.0, %v782
      %784 = vdwg.mxu0
      %785 = vst [vmem:[%s251] sm:$0xff] %v775
      %786 = vst [vmem:[%s251 + $0x8] sm:$0xff] %v777
      %787 = vst [vmem:[%s251 + $0x10] sm:$0xf] %v781
      %788 = vst [vmem:[%s251 + $0x18] sm:$0xf] %v783
      %p789 = scmp.lt.s32.totalorder %s17, 1
      %s790 = scalar_select %p789, %s17, 1
      %s791 = smul.addr %s790, 4
      %s792 = smul.addr %s791, 8
      %s793 = scalar_lea.vmem %s6, %s792
      // Predicated region
      $region45: #{tpu_custom_call.1} parent=43 // pred_check
        %p794 = pneg %p166
      $region46: #{tpu_custom_call.1} parent=43 // pred_check_branch
        %796 = sbr.rel (%p794) target = $region48
      $region47: #{tpu_custom_call.1} parent=43 // pred_region
        _
      $region48: #{tpu_custom_call.1} parent=43 // pred_fallthru
        _
    $region44: #{tpu_custom_call.1} parent=5 // pred_fallthru
      _
    %p797 = scmp.le.s32.totalorder 2, %s12
    // Predicated region
    $region49: #{tpu_custom_call.1} parent=5 // pred_check
      %p798 = pneg %p797
    $region50: #{tpu_custom_call.1} parent=5 // pred_check_branch
      %800 = sbr.rel (%p798) target = $region52
    $region51: #{tpu_custom_call.1} parent=5 // pred_region
      %s801 = ssub.s32 %s12, 2
      // Predicated region
      $region53: #{tpu_custom_call.1} parent=51 // pred_check
        %p802 = pneg %p172
      $region54: #{tpu_custom_call.1} parent=51 // pred_check_branch
        %804 = sbr.rel (%p802) target = $region56
      $region55: #{tpu_custom_call.1} parent=51 // pred_region
        %p805 = scmp.lt.s32.totalorder %s18, 1
        %s806 = scalar_select %p805, %s18, 1
        %s807 = smul.addr %s806, 4
        %s808 = smul.addr %s807, 8
        %s809 = scalar_lea.vmem %s6, %s808
      $region56: #{tpu_custom_call.1} parent=51 // pred_fallthru
        _
    $region52: #{tpu_custom_call.1} parent=5 // pred_fallthru
      _
  $region6: #{tpu_custom_call.1} parent=0 // loop_footer
    %s16 = sadd.s32 1, %s12
  $region7: #{tpu_custom_call.1} parent=0 // loop_footer_branch
    %11 = sbr.rel target = $region3
  $region8: #{tpu_custom_call.1} parent=0 // loop_exit
    _

</llo_original>
